<compile_context>
chip_gen: v5e
topology: v5e:2x2
jax: 0.10.0
libtpu: 0.0.40
codegen_flags: <defaults>
</compile_context>

<pallas_src>
import jax
import jax.numpy as jnp
from jax.experimental import pallas as pl
from jax.experimental.pallas import tpu as pltpu

HIDDEN = 256          # fixed by the module: Linear(256, 256)
MAX_B_TILE = 1024     # rows per grid step (bf16 working set ~4.3 MiB)


def core_kernel(h_ref, g_ref, wh_ref, wg_ref, b_ref, out_ref):
    # (B_TILE, 256) @ (256, 256) on the MXU, f32 accumulation.
    acc = jnp.dot(h_ref[...], wh_ref[...], preferred_element_type=jnp.float32)
    acc = acc + jnp.dot(g_ref[...], wg_ref[...],
                        preferred_element_type=jnp.float32)
    acc = acc + b_ref[...]                      # combined bias (b_h + b_g), f32
    out_ref[...] = jnp.maximum(acc, 0.0).astype(out_ref.dtype)


def _round_up(x, m):
    return ((x + m - 1) // m) * m


def _pick_b_tile(bs):
    """Batch tile: big (amortize per-step overhead) but >=2 grid steps when
    there is enough work, so both TensorCores are used on v7x."""
    if bs <= 256:
        # Too small to split profitably: single step covering the whole batch.
        return min(_round_up(max(bs, 8), 8), MAX_B_TILE)
    return min(MAX_B_TILE, _round_up(pl.cdiv(bs, 2), 8))


def core_forward(h, g, params, *, compute_dtype=jnp.bfloat16):
    """h, g: (bs, 256) f32.  params: (w_h, b_h, w_g, b_g) with w_* already in
    (in, out) layout (i.e. PyTorch Linear.weight transposed)."""
    w_h, b_h, w_g, b_g = params
    bs, dim = h.shape
    assert dim == HIDDEN and g.shape == (bs, HIDDEN)

    # Fold the two biases into one lane-dense (1, 256) f32 row (full array =
    # legal block shape; do not tile it).
    bias = (b_h + b_g).reshape(1, HIDDEN).astype(jnp.float32)

    # Narrow the streamed operands; MXU accumulation stays f32.
    h_c = h.astype(compute_dtype)
    g_c = g.astype(compute_dtype)
    wh_c = w_h.astype(compute_dtype)
    wg_c = w_g.astype(compute_dtype)

    b_tile = _pick_b_tile(bs)
    grid = (pl.cdiv(bs, b_tile),)   # ragged last block handled by Pallas

    bpe_in = jnp.dtype(compute_dtype).itemsize
    cost = pl.CostEstimate(
        flops=2 * 2 * bs * HIDDEN * HIDDEN,          # two matmuls
        transcendentals=0,
        bytes_accessed=(2 * bs * HIDDEN * bpe_in     # h, g streams
                        + bs * HIDDEN * 4            # f32 output stream
                        + 2 * HIDDEN * HIDDEN * bpe_in  # resident weights
                        + HIDDEN * 4),               # bias
    )

    out = pl.pallas_call(
        core_kernel,
        grid_spec=pltpu.PrefetchScalarGridSpec(
            num_scalar_prefetch=0,
            grid=grid,
            in_specs=[
                pl.BlockSpec((b_tile, HIDDEN), lambda i: (i, 0)),   # h tile
                pl.BlockSpec((b_tile, HIDDEN), lambda i: (i, 0)),   # g tile
                pl.BlockSpec((HIDDEN, HIDDEN), lambda i: (0, 0)),   # W_h (resident)
                pl.BlockSpec((HIDDEN, HIDDEN), lambda i: (0, 0)),   # W_g (resident)
                pl.BlockSpec((1, HIDDEN), lambda i: (0, 0)),        # bias (resident)
            ],
            out_specs=pl.BlockSpec((b_tile, HIDDEN), lambda i: (i, 0)),
        ),
        out_shape=jax.ShapeDtypeStruct((bs, HIDDEN), jnp.float32),
        compiler_params=pltpu.CompilerParams(
            dimension_semantics=("parallel",),
            vmem_limit_bytes=32 * 1024 * 1024,
        ),
        cost_estimate=cost,
    )(h_c, g_c, wh_c, wg_c, bias)

    return out


def reference_forward(h, g, params):
    """Pure-JAX f32 reference mirroring the PyTorch module."""
    w_h, b_h, w_g, b_g = params
    return jnp.maximum(h @ w_h + b_h + g @ w_g + b_g, 0.0)


def init_params(key):
    k1, k2, k3, k4 = jax.random.split(key, 4)
    # Weights stored as (in, out) == PyTorch Linear.weight.T
    w_h = jax.random.normal(k1, (HIDDEN, HIDDEN), jnp.float32) * 0.05
    b_h = jax.random.normal(k2, (HIDDEN,), jnp.float32) * 0.05
    w_g = jax.random.normal(k3, (HIDDEN, HIDDEN), jnp.float32) * 0.05
    b_g = jax.random.normal(k4, (HIDDEN,), jnp.float32) * 0.05
    return (w_h, b_h, w_g, b_g)


if __name__ == "__main__":
    key = jax.random.PRNGKey(0)
    k_params, k_h, k_g = jax.random.split(key, 3)

    bs = 2
    params = init_params(k_params)
    h = jax.random.normal(k_h, (bs, HIDDEN), jnp.float32)
    g = jax.random.normal(k_g, (bs, HIDDEN), jnp.float32)

    out = core_forward(h, g, params)
    out = jax.block_until_ready(out)

    ref = reference_forward(h, g, params)
    assert out.shape == (bs, HIDDEN)
    # bf16 inputs/weights with f32 accumulation: loosen tolerance vs f32 ref.
    assert jnp.allclose(out, ref, atol=2e-2, rtol=2e-2)

    print("KERNEL_OK")
</pallas_src>

<mosaic_0001>
module attributes {stable_mosaic.version = 11 : i64} {
  func.func @core_kernel(%arg0: i32, %arg1: memref<8x256xbf16, #tpu.memory_space<vmem>>, %arg2: memref<8x256xbf16, #tpu.memory_space<vmem>>, %arg3: memref<256x256xbf16, #tpu.memory_space<vmem>>, %arg4: memref<256x256xbf16, #tpu.memory_space<vmem>>, %arg5: memref<1x256xf32, #tpu.memory_space<vmem>>, %arg6: memref<8x256xf32, #tpu.memory_space<vmem>>) attributes {dimension_semantics = [#tpu.dimension_semantics<parallel>], iteration_bounds = array<i64: 1>, scalar_prefetch = 0 : i64, scratch_operands = 0 : i64, tpu.core_type = #tpu.core_type<tc>, window_params = [{transform_indices = @transform_0, window_bounds = array<i64: 8, 256>}, {transform_indices = @transform_1, window_bounds = array<i64: 8, 256>}, {pipeline_mode = #tpu.pipeline_mode<synchronous>, transform_indices = @transform_2, window_bounds = array<i64: 256, 256>}, {pipeline_mode = #tpu.pipeline_mode<synchronous>, transform_indices = @transform_3, window_bounds = array<i64: 256, 256>}, {pipeline_mode = #tpu.pipeline_mode<synchronous>, transform_indices = @transform_4, window_bounds = array<i64: 1, 256>}, {transform_indices = @transform_5, window_bounds = array<i64: 8, 256>}]} {
    %c0 = arith.constant 0 : index
    %c0_0 = arith.constant 0 : index
    %0 = vector.load %arg1[%c0, %c0_0] : memref<8x256xbf16, #tpu.memory_space<vmem>>, vector<8x256xbf16>
    %c0_1 = arith.constant 0 : index
    %c0_2 = arith.constant 0 : index
    %1 = vector.load %arg3[%c0_1, %c0_2] : memref<256x256xbf16, #tpu.memory_space<vmem>>, vector<256x256xbf16>
    %cst = arith.constant dense<0.000000e+00> : vector<8x256xf32>
    %2 = tpu.matmul %0, %1, %cst {dimension_numbers = #tpu.dot_dimension_numbers<[1], [0], [0], [1], [0, 0, 1, 1], [], []>} : vector<8x256xbf16>, vector<256x256xbf16>, vector<8x256xf32> -> vector<8x256xf32>
    %c0_3 = arith.constant 0 : index
    %c0_4 = arith.constant 0 : index
    %3 = vector.load %arg2[%c0_3, %c0_4] : memref<8x256xbf16, #tpu.memory_space<vmem>>, vector<8x256xbf16>
    %c0_5 = arith.constant 0 : index
    %c0_6 = arith.constant 0 : index
    %4 = vector.load %arg4[%c0_5, %c0_6] : memref<256x256xbf16, #tpu.memory_space<vmem>>, vector<256x256xbf16>
    %cst_7 = arith.constant dense<0.000000e+00> : vector<8x256xf32>
    %5 = tpu.matmul %3, %4, %cst_7 {dimension_numbers = #tpu.dot_dimension_numbers<[1], [0], [0], [1], [0, 0, 1, 1], [], []>} : vector<8x256xbf16>, vector<256x256xbf16>, vector<8x256xf32> -> vector<8x256xf32>
    %6 = arith.addf %2, %5 : vector<8x256xf32>
    %c0_8 = arith.constant 0 : index
    %c0_9 = arith.constant 0 : index
    %7 = vector.load %arg5[%c0_8, %c0_9] : memref<1x256xf32, #tpu.memory_space<vmem>>, vector<1x256xf32>
    %8 = vector.broadcast %7 : vector<1x256xf32> to vector<8x256xf32>
    %9 = arith.addf %6, %8 : vector<8x256xf32>
    %cst_10 = arith.constant 0.000000e+00 : f32
    %10 = vector.broadcast %cst_10 : f32 to vector<8x256xf32>
    %11 = arith.maximumf %9, %10 : vector<8x256xf32>
    %c0_11 = arith.constant 0 : index
    %c0_12 = arith.constant 0 : index
    %12 = vector.load %arg6[%c0_11, %c0_12] : memref<8x256xf32, #tpu.memory_space<vmem>>, vector<8x256xf32>
    tpu.vector_store %arg6[%c0_11, %c0_12], %11 {strides = array<i32>} : memref<8x256xf32, #tpu.memory_space<vmem>>, vector<8x256xf32>,
    return
  }
  func.func @transform_0(%arg0: i32) -> (i32, i32) {
    %c0_i32 = arith.constant 0 : i32
    %c0_i32_0 = arith.constant 0 : i32
    return %arg0, %c0_i32 : i32, i32
  }
  func.func @transform_1(%arg0: i32) -> (i32, i32) {
    %c0_i32 = arith.constant 0 : i32
    %c0_i32_0 = arith.constant 0 : i32
    return %arg0, %c0_i32 : i32, i32
  }
  func.func @transform_2(%arg0: i32) -> (i32, i32) {
    %c0_i32 = arith.constant 0 : i32
    %c0_i32_0 = arith.constant 0 : i32
    %c0_i32_1 = arith.constant 0 : i32
    return %c0_i32, %c0_i32_0 : i32, i32
  }
  func.func @transform_3(%arg0: i32) -> (i32, i32) {
    %c0_i32 = arith.constant 0 : i32
    %c0_i32_0 = arith.constant 0 : i32
    %c0_i32_1 = arith.constant 0 : i32
    return %c0_i32, %c0_i32_0 : i32, i32
  }
  func.func @transform_4(%arg0: i32) -> (i32, i32) {
    %c0_i32 = arith.constant 0 : i32
    %c0_i32_0 = arith.constant 0 : i32
    %c0_i32_1 = arith.constant 0 : i32
    return %c0_i32, %c0_i32_0 : i32, i32
  }
  func.func @transform_5(%arg0: i32) -> (i32, i32) {
    %c0_i32 = arith.constant 0 : i32
    %c0_i32_0 = arith.constant 0 : i32
    return %arg0, %c0_i32 : i32, i32
  }
}

</mosaic_0001>

<llo_original>
// kernel: tpu_custom_call.1
$region0: #{tpu_custom_call.1}
  #allocation0 [shape = 'u32[]', space=smem, size = 0x4, offset = 0x4, fixed_abs, tag = 'smem constant byte address 0x4 - core index']
  #allocation1 [shape = 'u32[72,128]{1,0:T(1,128)}', space=vmem, size = 0x9000, scoped, tag = 'internal scratch']
  %s0 = inlined_call_operand.hbm [shape: bf16[2,256], index: 0, kind: input, shape index: {}]
  %s1 = inlined_call_operand.hbm [shape: bf16[2,256], index: 1, kind: input, shape index: {}]
  %s2 = inlined_call_operand.hbm [shape: bf16[256,256], index: 2, kind: input, shape index: {}]
  %s3 = inlined_call_operand.hbm [shape: bf16[256,256], index: 3, kind: input, shape index: {}]
  %s4 = inlined_call_operand.vmem [shape: f32[1,256], index: 4, kind: input, shape index: {}]
  %s5 = inlined_call_operand.hbm [shape: f32[2,256], index: 5, kind: output, shape index: {}]
  %s6 = sld [smem:[#allocation0]]
  $region46: #{tpu_custom_call.1} parent=0
    _
  %s8 = ssub.s32 1, %s6
  %s9 = scalar_select 0, %s8, %s6
  $region1: #{tpu_custom_call.1} parent=0
    #allocation2 [shape = 'u8[4096]{0}', space=vmem, size = 0x1000, scoped, tag = 'input window, operand 0, single buffered']
    #allocation3 [shape = 's32[1]{0}', space=sflag, size = 0x4, scoped, tag = 'scoped memory for tpu_custom_call.1']
    #allocation4 [shape = 's32[1]{0}', space=sflag, size = 0x4, scoped, tag = 'scoped memory for tpu_custom_call.1']
    #allocation5 [shape = 'u8[4096]{0}', space=vmem, size = 0x1000, scoped, tag = 'input window, operand 1, single buffered']
    #allocation6 [shape = 's32[1]{0}', space=sflag, size = 0x4, scoped, tag = 'scoped memory for tpu_custom_call.1']
    #allocation7 [shape = 'u8[131072]{0}', space=vmem, size = 0x20000, scoped, tag = 'input window, operand 2, single buffered']
    #allocation8 [shape = 'u8[131072]{0}', space=vmem, size = 0x20000, scoped, tag = 'input window, operand 3, single buffered']
    #allocation9 [shape = 's32[1]{0}', space=sflag, size = 0x4, scoped, tag = 'scoped memory for tpu_custom_call.1']
    #allocation10 [shape = 'u8[8192]{0}', space=vmem, size = 0x2000, scoped, tag = 'output window, operand 0, single buffered']
    %10 = vsyncpa [#allocation3], 0
    %11 = vsyncpa [#allocation6], 0
    %12 = vsyncpa [#allocation9], 0
    %13 = vsyncpa [#allocation4], 0
    // Predicated region
    $region2: #{tpu_custom_call.1} parent=1 // pred_check
      _
    $region3: #{tpu_custom_call.1} parent=1 // pred_check_branch
      %15 = sbr.rel (0) target = $region5
    $region4: #{tpu_custom_call.1} parent=1 // pred_region
      %17 = vsyncadd [#allocation3], 96
      %s18 = sshll.u32 %s0, 4
      %s19 = int_to_ptr.hbm [resolvable:$true] %s18
      %s20 = sshll.u32 [#allocation2], 4
      %s21 = int_to_ptr.vmem [resolvable:$true] %s20
      %26 = dma.hbm_to_vmem [thread:$0]  %s19, 32, %s21, [#allocation3], 32, 32, 2
    $region5: #{tpu_custom_call.1} parent=1 // pred_fallthru
      _
    // Predicated region
    $region6: #{tpu_custom_call.1} parent=1 // pred_check
      _
    $region7: #{tpu_custom_call.1} parent=1 // pred_check_branch
      %28 = sbr.rel (0) target = $region9
    $region8: #{tpu_custom_call.1} parent=1 // pred_region
      %30 = vsyncadd [#allocation6], 96
      %s31 = sshll.u32 %s1, 4
      %s32 = int_to_ptr.hbm [resolvable:$true] %s31
      %s33 = sshll.u32 [#allocation5], 4
      %s34 = int_to_ptr.vmem [resolvable:$true] %s33
      %39 = dma.hbm_to_vmem [thread:$0]  %s32, 32, %s34, [#allocation6], 32, 32, 2
    $region9: #{tpu_custom_call.1} parent=1 // pred_fallthru
      _
    // Predicated region
    $region10: #{tpu_custom_call.1} parent=1 // pred_check
      _
    $region11: #{tpu_custom_call.1} parent=1 // pred_check_branch
      %41 = sbr.rel (0) target = $region13
    $region12: #{tpu_custom_call.1} parent=1 // pred_region
      %43 = vsyncadd [#allocation6], 0
      %s44 = sshll.u32 %s2, 4
      %s45 = int_to_ptr.hbm [resolvable:$true] %s44
      %s46 = sshll.u32 [#allocation7], 4
      %s47 = int_to_ptr.vmem [resolvable:$true] %s46
      %52 = dma.hbm_to_vmem [thread:$0]  %s45, 4096, %s47, [#allocation6], 128, 128, 8
    $region13: #{tpu_custom_call.1} parent=1 // pred_fallthru
      _
    // Predicated region
    $region14: #{tpu_custom_call.1} parent=1 // pred_check
      _
    $region15: #{tpu_custom_call.1} parent=1 // pred_check_branch
      %54 = sbr.rel (0) target = $region17
    $region16: #{tpu_custom_call.1} parent=1 // pred_region
      %56 = vsyncadd [#allocation9], 0
      %s57 = sshll.u32 %s3, 4
      %s58 = int_to_ptr.hbm [resolvable:$true] %s57
      %s59 = sshll.u32 [#allocation8], 4
      %s60 = int_to_ptr.vmem [resolvable:$true] %s59
      %65 = dma.hbm_to_vmem [thread:$0]  %s58, 4096, %s60, [#allocation9], 128, 128, 8
    $region17: #{tpu_custom_call.1} parent=1 // pred_fallthru
      _
    // Predicated region
    $region18: #{tpu_custom_call.1} parent=1 // pred_check
      _
    $region19: #{tpu_custom_call.1} parent=1 // pred_check_branch
      %67 = sbr.rel (0) target = $region21
    $region20: #{tpu_custom_call.1} parent=1 // pred_region
      _
    $region21: #{tpu_custom_call.1} parent=1 // pred_fallthru
      _
    // Predicated region
    $region22: #{tpu_custom_call.1} parent=1 // pred_check
      _
    $region23: #{tpu_custom_call.1} parent=1 // pred_check_branch
      %69 = sbr.rel (0) target = $region25
    $region24: #{tpu_custom_call.1} parent=1 // pred_region
      %71 = dma.done [#allocation3], 128
    $region25: #{tpu_custom_call.1} parent=1 // pred_fallthru
      _
    // Predicated region
    $region26: #{tpu_custom_call.1} parent=1 // pred_check
      _
    $region27: #{tpu_custom_call.1} parent=1 // pred_check_branch
      %73 = sbr.rel (0) target = $region29
    $region28: #{tpu_custom_call.1} parent=1 // pred_region
      %75 = dma.done [#allocation6], 128
    $region29: #{tpu_custom_call.1} parent=1 // pred_fallthru
      _
    // Predicated region
    $region30: #{tpu_custom_call.1} parent=1 // pred_check
      _
    $region31: #{tpu_custom_call.1} parent=1 // pred_check_branch
      %77 = sbr.rel (0) target = $region33
    $region32: #{tpu_custom_call.1} parent=1 // pred_region
      %79 = dma.done [#allocation6], 4096
    $region33: #{tpu_custom_call.1} parent=1 // pred_fallthru
      _
    // Predicated region
    $region34: #{tpu_custom_call.1} parent=1 // pred_check
      _
    $region35: #{tpu_custom_call.1} parent=1 // pred_check_branch
      %81 = sbr.rel (0) target = $region37
    $region36: #{tpu_custom_call.1} parent=1 // pred_region
      %83 = dma.done [#allocation9], 4096
    $region37: #{tpu_custom_call.1} parent=1 // pred_fallthru
      _
    %v84 = vld [vmem:[#allocation2] sm:$0x3]
    %v85 = vld [vmem:[#allocation2 + $0x2] sm:$0x3]
    %v86 = vld [vmem:[#allocation2 + $0x4] sm:$0x3]
    %v87 = vld [vmem:[#allocation2 + $0x6] sm:$0x3]
    %v88 = vld [vmem:[#allocation7] sm:$0xff]
    %v89 = vld [vmem:[#allocation7 + $0x8] sm:$0xff]
    %v90 = vld [vmem:[#allocation7 + $0x10] sm:$0xff]
    %v91 = vld [vmem:[#allocation7 + $0x18] sm:$0xff]
    %v92 = vld [vmem:[#allocation7 + $0x20] sm:$0xff]
    %v93 = vld [vmem:[#allocation7 + $0x28] sm:$0xff]
    %v94 = vld [vmem:[#allocation7 + $0x30] sm:$0xff]
    %v95 = vld [vmem:[#allocation7 + $0x38] sm:$0xff]
    %v96 = vld [vmem:[#allocation7 + $0x40] sm:$0xff]
    %v97 = vld [vmem:[#allocation7 + $0x48] sm:$0xff]
    %v98 = vld [vmem:[#allocation7 + $0x50] sm:$0xff]
    %v99 = vld [vmem:[#allocation7 + $0x58] sm:$0xff]
    %v100 = vld [vmem:[#allocation7 + $0x60] sm:$0xff]
    %v101 = vld [vmem:[#allocation7 + $0x68] sm:$0xff]
    %v102 = vld [vmem:[#allocation7 + $0x70] sm:$0xff]
    %v103 = vld [vmem:[#allocation7 + $0x78] sm:$0xff]
    %v104 = vld [vmem:[#allocation7 + $0x80] sm:$0xff]
    %v105 = vld [vmem:[#allocation7 + $0x88] sm:$0xff]
    %v106 = vld [vmem:[#allocation7 + $0x90] sm:$0xff]
    %v107 = vld [vmem:[#allocation7 + $0x98] sm:$0xff]
    %v108 = vld [vmem:[#allocation7 + $0xa0] sm:$0xff]
    %v109 = vld [vmem:[#allocation7 + $0xa8] sm:$0xff]
    %v110 = vld [vmem:[#allocation7 + $0xb0] sm:$0xff]
    %v111 = vld [vmem:[#allocation7 + $0xb8] sm:$0xff]
    %v112 = vld [vmem:[#allocation7 + $0xc0] sm:$0xff]
    %v113 = vld [vmem:[#allocation7 + $0xc8] sm:$0xff]
    %v114 = vld [vmem:[#allocation7 + $0xd0] sm:$0xff]
    %v115 = vld [vmem:[#allocation7 + $0xd8] sm:$0xff]
    %v116 = vld [vmem:[#allocation7 + $0xe0] sm:$0xff]
    %v117 = vld [vmem:[#allocation7 + $0xe8] sm:$0xff]
    %v118 = vld [vmem:[#allocation7 + $0xf0] sm:$0xff]
    %v119 = vld [vmem:[#allocation7 + $0xf8] sm:$0xff]
    %v120 = vld [vmem:[#allocation5] sm:$0x3]
    %v121 = vld [vmem:[#allocation5 + $0x2] sm:$0x3]
    %v122 = vld [vmem:[#allocation5 + $0x4] sm:$0x3]
    %v123 = vld [vmem:[#allocation5 + $0x6] sm:$0x3]
    %v124 = vld [vmem:[#allocation8] sm:$0xff]
    %v125 = vld [vmem:[#allocation8 + $0x8] sm:$0xff]
    %v126 = vld [vmem:[#allocation8 + $0x10] sm:$0xff]
    %v127 = vld [vmem:[#allocation8 + $0x18] sm:$0xff]
    %v128 = vld [vmem:[#allocation8 + $0x20] sm:$0xff]
    %v129 = vld [vmem:[#allocation8 + $0x28] sm:$0xff]
    %v130 = vld [vmem:[#allocation8 + $0x30] sm:$0xff]
    %v131 = vld [vmem:[#allocation8 + $0x38] sm:$0xff]
    %v132 = vld [vmem:[#allocation8 + $0x40] sm:$0xff]
    %v133 = vld [vmem:[#allocation8 + $0x48] sm:$0xff]
    %v134 = vld [vmem:[#allocation8 + $0x50] sm:$0xff]
    %v135 = vld [vmem:[#allocation8 + $0x58] sm:$0xff]
    %v136 = vld [vmem:[#allocation8 + $0x60] sm:$0xff]
    %v137 = vld [vmem:[#allocation8 + $0x68] sm:$0xff]
    %v138 = vld [vmem:[#allocation8 + $0x70] sm:$0xff]
    %v139 = vld [vmem:[#allocation8 + $0x78] sm:$0xff]
    %v140 = vld [vmem:[#allocation8 + $0x80] sm:$0xff]
    %v141 = vld [vmem:[#allocation8 + $0x88] sm:$0xff]
    %v142 = vld [vmem:[#allocation8 + $0x90] sm:$0xff]
    %v143 = vld [vmem:[#allocation8 + $0x98] sm:$0xff]
    %v144 = vld [vmem:[#allocation8 + $0xa0] sm:$0xff]
    %v145 = vld [vmem:[#allocation8 + $0xa8] sm:$0xff]
    %v146 = vld [vmem:[#allocation8 + $0xb0] sm:$0xff]
    %v147 = vld [vmem:[#allocation8 + $0xb8] sm:$0xff]
    %v148 = vld [vmem:[#allocation8 + $0xc0] sm:$0xff]
    %v149 = vld [vmem:[#allocation8 + $0xc8] sm:$0xff]
    %v150 = vld [vmem:[#allocation8 + $0xd0] sm:$0xff]
    %v151 = vld [vmem:[#allocation8 + $0xd8] sm:$0xff]
    %v152 = vld [vmem:[#allocation8 + $0xe0] sm:$0xff]
    %v153 = vld [vmem:[#allocation8 + $0xe8] sm:$0xff]
    %v154 = vld [vmem:[#allocation8 + $0xf0] sm:$0xff]
    %v155 = vld [vmem:[#allocation8 + $0xf8] sm:$0xff]
    %157 = vst [vmem:[#allocation1] ss:$9 sm:$0xff] %v120
    %s159 = scalar_lea.vmem [#allocation1], 1
    %160 = vst [vmem:[%s159] ss:$9 sm:$0xff] %v121
    %s162 = scalar_lea.vmem [#allocation1], 2
    %163 = vst [vmem:[%s162] ss:$9 sm:$0xff] %v122
    %s165 = scalar_lea.vmem [#allocation1], 3
    %166 = vst [vmem:[%s165] ss:$9 sm:$0xff] %v123
    %v167 = vld [vmem:[#allocation1] sm:$0xff]
    %v168 = vld [vmem:[#allocation1 + $0x9] sm:$0xff]
    %v203 = vunpack.c.l.b16 %v124
    %v204 = vunpack.c.h.b16 %v124
    %v205 = vunpack.c.l.b16 %v125
    %v206 = vunpack.c.h.b16 %v125
    %v207 = vunpack.c.l.b16 %v126
    %v208 = vunpack.c.h.b16 %v126
    %v209 = vunpack.c.l.b16 %v127
    %v210 = vunpack.c.h.b16 %v127
    %v211 = vunpack.c.l.b16 %v128
    %v212 = vunpack.c.h.b16 %v128
    %v213 = vunpack.c.l.b16 %v129
    %v214 = vunpack.c.h.b16 %v129
    %v215 = vunpack.c.l.b16 %v130
    %v216 = vunpack.c.h.b16 %v130
    %v217 = vunpack.c.l.b16 %v131
    %v218 = vunpack.c.h.b16 %v131
    %v219 = vunpack.c.l.b16 %v132
    %v220 = vunpack.c.h.b16 %v132
    %v221 = vunpack.c.l.b16 %v133
    %v222 = vunpack.c.h.b16 %v133
    %v223 = vunpack.c.l.b16 %v134
    %v224 = vunpack.c.h.b16 %v134
    %v225 = vunpack.c.l.b16 %v135
    %v226 = vunpack.c.h.b16 %v135
    %v227 = vunpack.c.l.b16 %v136
    %v228 = vunpack.c.h.b16 %v136
    %v229 = vunpack.c.l.b16 %v137
    %v230 = vunpack.c.h.b16 %v137
    %v231 = vunpack.c.l.b16 %v138
    %v232 = vunpack.c.h.b16 %v138
    %v233 = vunpack.c.l.b16 %v139
    %v234 = vunpack.c.h.b16 %v139
    %v235 = vunpack.c.l.b16 %v140
    %v236 = vunpack.c.h.b16 %v140
    %v237 = vunpack.c.l.b16 %v141
    %v238 = vunpack.c.h.b16 %v141
    %v239 = vunpack.c.l.b16 %v142
    %v240 = vunpack.c.h.b16 %v142
    %v241 = vunpack.c.l.b16 %v143
    %v242 = vunpack.c.h.b16 %v143
    %v243 = vunpack.c.l.b16 %v144
    %v244 = vunpack.c.h.b16 %v144
    %v245 = vunpack.c.l.b16 %v145
    %v246 = vunpack.c.h.b16 %v145
    %v247 = vunpack.c.l.b16 %v146
    %v248 = vunpack.c.h.b16 %v146
    %v249 = vunpack.c.l.b16 %v147
    %v250 = vunpack.c.h.b16 %v147
    %v251 = vunpack.c.l.b16 %v148
    %v252 = vunpack.c.h.b16 %v148
    %v253 = vunpack.c.l.b16 %v149
    %v254 = vunpack.c.h.b16 %v149
    %v255 = vunpack.c.l.b16 %v150
    %v256 = vunpack.c.h.b16 %v150
    %v257 = vunpack.c.l.b16 %v151
    %v258 = vunpack.c.h.b16 %v151
    %v259 = vunpack.c.l.b16 %v152
    %v260 = vunpack.c.h.b16 %v152
    %v261 = vunpack.c.l.b16 %v153
    %v262 = vunpack.c.h.b16 %v153
    %v263 = vunpack.c.l.b16 %v154
    %v264 = vunpack.c.h.b16 %v154
    %v265 = vunpack.c.l.b16 %v155
    %v266 = vunpack.c.h.b16 %v155
    %v267 = vpack.c.b16 %v205, %v203
    %v268 = vpack.c.b16 %v206, %v204
    %v269 = vpack.c.b16 %v209, %v207
    %v270 = vpack.c.b16 %v210, %v208
    %v271 = vpack.c.b16 %v213, %v211
    %v272 = vpack.c.b16 %v214, %v212
    %v273 = vpack.c.b16 %v217, %v215
    %v274 = vpack.c.b16 %v218, %v216
    %v275 = vpack.c.b16 %v221, %v219
    %v276 = vpack.c.b16 %v222, %v220
    %v277 = vpack.c.b16 %v225, %v223
    %v278 = vpack.c.b16 %v226, %v224
    %v279 = vpack.c.b16 %v229, %v227
    %v280 = vpack.c.b16 %v230, %v228
    %v281 = vpack.c.b16 %v233, %v231
    %v282 = vpack.c.b16 %v234, %v232
    %v283 = vpack.c.b16 %v237, %v235
    %v284 = vpack.c.b16 %v238, %v236
    %v285 = vpack.c.b16 %v241, %v239
    %v286 = vpack.c.b16 %v242, %v240
    %v287 = vpack.c.b16 %v245, %v243
    %v288 = vpack.c.b16 %v246, %v244
    %v289 = vpack.c.b16 %v249, %v247
    %v290 = vpack.c.b16 %v250, %v248
    %v291 = vpack.c.b16 %v253, %v251
    %v292 = vpack.c.b16 %v254, %v252
    %v293 = vpack.c.b16 %v257, %v255
    %v294 = vpack.c.b16 %v258, %v256
    %v295 = vpack.c.b16 %v261, %v259
    %v296 = vpack.c.b16 %v262, %v260
    %v297 = vpack.c.b16 %v265, %v263
    %v298 = vpack.c.b16 %v266, %v264
    %331 = vmatpush.bf16.msra.mxu0 %v281
    %332 = vmatpush.bf16.msra.mxu0 %v279
    %333 = vmatpush.bf16.msra.mxu0 %v277
    %334 = vmatpush.bf16.msra.mxu0 %v275
    %335 = vmatpush.bf16.msra.mxu0 %v273
    %336 = vmatpush.bf16.msra.mxu0 %v271
    %337 = vmatpush.bf16.msra.mxu0 %v269
    %338 = vmatpush.bf16.msra.mxu0 %v267
    %339 = vmatmul.bf16.gmra.mxu0 %v167
    %v340 = vpop.f32.mrf.mxu0
    %v341 = vadd.f32 0.0, %v340
    %v342 = vpop.f32.mrf.mxu0
    %343 = vdwg.mxu0
    %344 = vmatpush.bf16.msra.mxu0 %v297
    %345 = vmatpush.bf16.msra.mxu0 %v295
    %346 = vmatpush.bf16.msra.mxu0 %v293
    %347 = vmatpush.bf16.msra.mxu0 %v291
    %348 = vmatpush.bf16.msra.mxu0 %v289
    %349 = vmatpush.bf16.msra.mxu0 %v287
    %350 = vmatpush.bf16.msra.mxu0 %v285
    %351 = vmatpush.bf16.msra.mxu0 %v283
    %352 = vmatmul.bf16.gmra.mxu0 %v168
    %v353 = vpop.f32.mrf.mxu0
    %v354 = vadd.f32 %v341, %v353
    %v355 = vpop.f32.mrf.mxu0
    %356 = vdwg.mxu0
    %357 = vmatpush.bf16.msra.mxu0 %v282
    %358 = vmatpush.bf16.msra.mxu0 %v280
    %359 = vmatpush.bf16.msra.mxu0 %v278
    %360 = vmatpush.bf16.msra.mxu0 %v276
    %361 = vmatpush.bf16.msra.mxu0 %v274
    %362 = vmatpush.bf16.msra.mxu0 %v272
    %363 = vmatpush.bf16.msra.mxu0 %v270
    %364 = vmatpush.bf16.msra.mxu0 %v268
    %365 = vmatmul.bf16.gmra.mxu0 %v167
    %v366 = vpop.f32.mrf.mxu0
    %v367 = vadd.f32 0.0, %v366
    %v368 = vpop.f32.mrf.mxu0
    %369 = vdwg.mxu0
    %370 = vmatpush.bf16.msra.mxu0 %v298
    %371 = vmatpush.bf16.msra.mxu0 %v296
    %372 = vmatpush.bf16.msra.mxu0 %v294
    %373 = vmatpush.bf16.msra.mxu0 %v292
    %374 = vmatpush.bf16.msra.mxu0 %v290
    %375 = vmatpush.bf16.msra.mxu0 %v288
    %376 = vmatpush.bf16.msra.mxu0 %v286
    %377 = vmatpush.bf16.msra.mxu0 %v284
    %378 = vmatmul.bf16.gmra.mxu0 %v168
    %v379 = vpop.f32.mrf.mxu0
    %v380 = vadd.f32 %v367, %v379
    %v381 = vpop.f32.mrf.mxu0
    %382 = vdwg.mxu0
    %384 = vst [vmem:[#allocation1] ss:$9 sm:$0xff] %v84
    %s386 = scalar_lea.vmem [#allocation1], 1
    %387 = vst [vmem:[%s386] ss:$9 sm:$0xff] %v85
    %s389 = scalar_lea.vmem [#allocation1], 2
    %390 = vst [vmem:[%s389] ss:$9 sm:$0xff] %v86
    %s392 = scalar_lea.vmem [#allocation1], 3
    %393 = vst [vmem:[%s392] ss:$9 sm:$0xff] %v87
    %v394 = vld [vmem:[#allocation1] sm:$0xff]
    %v395 = vld [vmem:[#allocation1 + $0x9] sm:$0xff]
    %v430 = vunpack.c.l.b16 %v88
    %v431 = vunpack.c.h.b16 %v88
    %v432 = vunpack.c.l.b16 %v89
    %v433 = vunpack.c.h.b16 %v89
    %v434 = vunpack.c.l.b16 %v90
    %v435 = vunpack.c.h.b16 %v90
    %v436 = vunpack.c.l.b16 %v91
    %v437 = vunpack.c.h.b16 %v91
    %v438 = vunpack.c.l.b16 %v92
    %v439 = vunpack.c.h.b16 %v92
    %v440 = vunpack.c.l.b16 %v93
    %v441 = vunpack.c.h.b16 %v93
    %v442 = vunpack.c.l.b16 %v94
    %v443 = vunpack.c.h.b16 %v94
    %v444 = vunpack.c.l.b16 %v95
    %v445 = vunpack.c.h.b16 %v95
    %v446 = vunpack.c.l.b16 %v96
    %v447 = vunpack.c.h.b16 %v96
    %v448 = vunpack.c.l.b16 %v97
    %v449 = vunpack.c.h.b16 %v97
    %v450 = vunpack.c.l.b16 %v98
    %v451 = vunpack.c.h.b16 %v98
    %v452 = vunpack.c.l.b16 %v99
    %v453 = vunpack.c.h.b16 %v99
    %v454 = vunpack.c.l.b16 %v100
    %v455 = vunpack.c.h.b16 %v100
    %v456 = vunpack.c.l.b16 %v101
    %v457 = vunpack.c.h.b16 %v101
    %v458 = vunpack.c.l.b16 %v102
    %v459 = vunpack.c.h.b16 %v102
    %v460 = vunpack.c.l.b16 %v103
    %v461 = vunpack.c.h.b16 %v103
    %v462 = vunpack.c.l.b16 %v104
    %v463 = vunpack.c.h.b16 %v104
    %v464 = vunpack.c.l.b16 %v105
    %v465 = vunpack.c.h.b16 %v105
    %v466 = vunpack.c.l.b16 %v106
    %v467 = vunpack.c.h.b16 %v106
    %v468 = vunpack.c.l.b16 %v107
    %v469 = vunpack.c.h.b16 %v107
    %v470 = vunpack.c.l.b16 %v108
    %v471 = vunpack.c.h.b16 %v108
    %v472 = vunpack.c.l.b16 %v109
    %v473 = vunpack.c.h.b16 %v109
    %v474 = vunpack.c.l.b16 %v110
    %v475 = vunpack.c.h.b16 %v110
    %v476 = vunpack.c.l.b16 %v111
    %v477 = vunpack.c.h.b16 %v111
    %v478 = vunpack.c.l.b16 %v112
    %v479 = vunpack.c.h.b16 %v112
    %v480 = vunpack.c.l.b16 %v113
    %v481 = vunpack.c.h.b16 %v113
    %v482 = vunpack.c.l.b16 %v114
    %v483 = vunpack.c.h.b16 %v114
    %v484 = vunpack.c.l.b16 %v115
    %v485 = vunpack.c.h.b16 %v115
    %v486 = vunpack.c.l.b16 %v116
    %v487 = vunpack.c.h.b16 %v116
    %v488 = vunpack.c.l.b16 %v117
    %v489 = vunpack.c.h.b16 %v117
    %v490 = vunpack.c.l.b16 %v118
    %v491 = vunpack.c.h.b16 %v118
    %v492 = vunpack.c.l.b16 %v119
    %v493 = vunpack.c.h.b16 %v119
    %v494 = vpack.c.b16 %v432, %v430
    %v495 = vpack.c.b16 %v433, %v431
    %v496 = vpack.c.b16 %v436, %v434
    %v497 = vpack.c.b16 %v437, %v435
    %v498 = vpack.c.b16 %v440, %v438
    %v499 = vpack.c.b16 %v441, %v439
    %v500 = vpack.c.b16 %v444, %v442
    %v501 = vpack.c.b16 %v445, %v443
    %v502 = vpack.c.b16 %v448, %v446
    %v503 = vpack.c.b16 %v449, %v447
    %v504 = vpack.c.b16 %v452, %v450
    %v505 = vpack.c.b16 %v453, %v451
    %v506 = vpack.c.b16 %v456, %v454
    %v507 = vpack.c.b16 %v457, %v455
    %v508 = vpack.c.b16 %v460, %v458
    %v509 = vpack.c.b16 %v461, %v459
    %v510 = vpack.c.b16 %v464, %v462
    %v511 = vpack.c.b16 %v465, %v463
    %v512 = vpack.c.b16 %v468, %v466
    %v513 = vpack.c.b16 %v469, %v467
    %v514 = vpack.c.b16 %v472, %v470
    %v515 = vpack.c.b16 %v473, %v471
    %v516 = vpack.c.b16 %v476, %v474
    %v517 = vpack.c.b16 %v477, %v475
    %v518 = vpack.c.b16 %v480, %v478
    %v519 = vpack.c.b16 %v481, %v479
    %v520 = vpack.c.b16 %v484, %v482
    %v521 = vpack.c.b16 %v485, %v483
    %v522 = vpack.c.b16 %v488, %v486
    %v523 = vpack.c.b16 %v489, %v487
    %v524 = vpack.c.b16 %v492, %v490
    %v525 = vpack.c.b16 %v493, %v491
    %558 = vmatpush.bf16.msra.mxu0 %v508
    %559 = vmatpush.bf16.msra.mxu0 %v506
    %560 = vmatpush.bf16.msra.mxu0 %v504
    %561 = vmatpush.bf16.msra.mxu0 %v502
    %562 = vmatpush.bf16.msra.mxu0 %v500
    %563 = vmatpush.bf16.msra.mxu0 %v498
    %564 = vmatpush.bf16.msra.mxu0 %v496
    %565 = vmatpush.bf16.msra.mxu0 %v494
    %566 = vmatmul.bf16.gmra.mxu0 %v394
    %v567 = vpop.f32.mrf.mxu0
    %v568 = vadd.f32 %v354, %v567
    %v569 = vpop.f32.mrf.mxu0
    %570 = vdwg.mxu0
    %571 = vmatpush.bf16.msra.mxu0 %v524
    %572 = vmatpush.bf16.msra.mxu0 %v522
    %573 = vmatpush.bf16.msra.mxu0 %v520
    %574 = vmatpush.bf16.msra.mxu0 %v518
    %575 = vmatpush.bf16.msra.mxu0 %v516
    %576 = vmatpush.bf16.msra.mxu0 %v514
    %577 = vmatpush.bf16.msra.mxu0 %v512
    %578 = vmatpush.bf16.msra.mxu0 %v510
    %579 = vmatmul.bf16.gmra.mxu0 %v395
    %v580 = vpop.f32.mrf.mxu0
    %v581 = vadd.f32 %v568, %v580
    %v582 = vpop.f32.mrf.mxu0
    %583 = vdwg.mxu0
    %584 = vmatpush.bf16.msra.mxu0 %v509
    %585 = vmatpush.bf16.msra.mxu0 %v507
    %586 = vmatpush.bf16.msra.mxu0 %v505
    %587 = vmatpush.bf16.msra.mxu0 %v503
    %588 = vmatpush.bf16.msra.mxu0 %v501
    %589 = vmatpush.bf16.msra.mxu0 %v499
    %590 = vmatpush.bf16.msra.mxu0 %v497
    %591 = vmatpush.bf16.msra.mxu0 %v495
    %592 = vmatmul.bf16.gmra.mxu0 %v394
    %v593 = vpop.f32.mrf.mxu0
    %v594 = vadd.f32 %v380, %v593
    %v595 = vpop.f32.mrf.mxu0
    %596 = vdwg.mxu0
    %597 = vmatpush.bf16.msra.mxu0 %v525
    %598 = vmatpush.bf16.msra.mxu0 %v523
    %599 = vmatpush.bf16.msra.mxu0 %v521
    %600 = vmatpush.bf16.msra.mxu0 %v519
    %601 = vmatpush.bf16.msra.mxu0 %v517
    %602 = vmatpush.bf16.msra.mxu0 %v515
    %603 = vmatpush.bf16.msra.mxu0 %v513
    %604 = vmatpush.bf16.msra.mxu0 %v511
    %605 = vmatmul.bf16.gmra.mxu0 %v395
    %v606 = vpop.f32.mrf.mxu0
    %v607 = vadd.f32 %v594, %v606
    %v608 = vpop.f32.mrf.mxu0
    %609 = vdwg.mxu0
    %v610 = vld [vmem:[%s4] sm:$0x3]
    %v612 = vperm.slane %v610, 0
    %v613 = vperm.slane %v610, 1
    %v616 = vadd.f32 %v581, %v612
    %v617 = vadd.f32 %v607, %v613
    %v618 = vmax.f32 %v616, 0.0
    %v619 = vmax.f32 %v617, 0.0
    %v622 = vrot.slane %v619, 6
    %vm623 = vcmask 1041408
    %v624 = vsel %vm623, %v618, %v622
    %vm625 = vcmask 1043458
    %v626 = vsel %vm625, %v618, %v622
    %v627 = vrot.slane %v626, 2
    %vm628 = vcmask 1045508
    %v629 = vsel %vm628, %v618, %v622
    %v630 = vrot.slane %v629, 4
    %vm631 = vcmask 1045504
    %v632 = vsel %vm631, %v622, %v618
    %v633 = vrot.slane %v632, 6
    %638 = vst [vmem:[#allocation10] sm:$0xf] %v624
    %639 = vst [vmem:[#allocation10 + $0x4] sm:$0xf] %v627
    %640 = vst [vmem:[#allocation10 + $0x8] sm:$0xf] %v630
    %641 = vst [vmem:[#allocation10 + $0xc] sm:$0xf] %v633
    // Predicated region
    $region38: #{tpu_custom_call.1} parent=1 // pred_check
      _
    $region39: #{tpu_custom_call.1} parent=1 // pred_check_branch
      %643 = sbr.rel (0) target = $region41
    $region40: #{tpu_custom_call.1} parent=1 // pred_region
      %645 = vsyncadd [#allocation4], 192
      %s646 = sshll.u32 [#allocation10], 4
      %s647 = int_to_ptr.vmem [resolvable:$true] %s646
      %s648 = sshll.u32 %s5, 4
      %s649 = int_to_ptr.hbm [resolvable:$true] %s648
      %654 = dma.vmem_to_hbm [thread:$0]  %s647, 64, %s649, [#allocation4], 64, 64, 4
    $region41: #{tpu_custom_call.1} parent=1 // pred_fallthru
      _
    // Predicated region
    $region42: #{tpu_custom_call.1} parent=1 // pred_check
      _
    $region43: #{tpu_custom_call.1} parent=1 // pred_check_branch
      %656 = sbr.rel (0) target = $region45
    $region44: #{tpu_custom_call.1} parent=1 // pred_region
      %658 = dma.done [#allocation4], 256
    $region45: #{tpu_custom_call.1} parent=1 // pred_fallthru
      _
    %659 = vsyncpa [#allocation3], 1
    %660 = vsyncpa [#allocation6], 1
    %661 = vsyncpa [#allocation9], 1
    %662 = vsyncpa [#allocation4], 1

</llo_original>
